<compile_context>
chip_gen: v6e
topology: v6e:2x2x1
jax: 0.10.0
libtpu: 0.0.40
codegen_flags: <defaults>
</compile_context>

<pallas_src>
import jax
import jax.numpy as jnp
from jax import lax
from jax.experimental import pallas as pl
from jax.experimental.pallas import tpu as pltpu


def _round_up(x, m):
    return ((x + m - 1) // m) * m


def _linear_kernel(x_ref, w_ref, b_ref, o_ref, acc_ref):
    # x_ref  : (tm, tk)  input row tile, K on the lane axis
    # w_ref  : (tn, tk)  weight tile in native [out, in] layout, K on lanes
    # b_ref  : (1,  tn)  f32 bias slice (added once, at the last K step)
    # o_ref  : (tm, tn)  output tile (lane-dense, multiple of 128 wide)
    # acc_ref: (tm, tn)  f32 accumulator, resident across the K grid axis
    k = pl.program_id(2)

    @pl.when(k == 0)
    def _():
        acc_ref[...] = jnp.zeros_like(acc_ref)

    acc_ref[...] += lax.dot_general(
        x_ref[...], w_ref[...],
        dimension_numbers=(((1,), (1,)), ((), ())),   # contract K with K
        preferred_element_type=jnp.float32,
    )

    @pl.when(k == pl.num_programs(2) - 1)
    def _():
        o_ref[...] = (acc_ref[...] + b_ref[...]).astype(o_ref.dtype)


def ost_model_forward(x, weight, bias, *, tm=128, tn=128, tk=256,
                      use_bf16=False, min_pallas_elems=1 << 14,
                      force_pallas=False):
    """Pallas implementation of OSTModel(nn.Linear(in, out)).forward(x).

    x:      [B, in_features]
    weight: [out_features, in_features]   (PyTorch nn.Linear convention)
    bias:   [out_features]
    returns [B, out_features]
    """
    B, K = x.shape
    N, K2 = weight.shape
    assert K == K2, "in_features mismatch"
    out_dtype = x.dtype

    # Tiny problems: pallas_call fixed overhead + lane padding dominate; let
    # XLA's fused dot handle them.
    if not force_pallas and (B * K < min_pallas_elems and K * N < min_pallas_elems):
        return (x @ weight.T + bias[None, :]).astype(out_dtype)

    # Clamp tiles to the (lane-/sublane-padded) problem to bound padding waste,
    # while keeping lane-dense (x128) N/K tiles and packing-friendly (x16) M.
    tm = min(tm, _round_up(B, 16))
    tn = min(tn, _round_up(N, 128))
    tk = min(tk, _round_up(K, 128))

    Bp = _round_up(B, tm)
    Np = _round_up(N, tn)
    Kp = _round_up(K, tk)

    cdtype = jnp.bfloat16 if use_bf16 else x.dtype

    # Zero-pad to tile multiples (zeros in K contribute nothing; padded rows /
    # cols of the output are sliced off below).  No weight transpose.
    xp = x.astype(cdtype)
    if (Bp, Kp) != (B, K):
        xp = jnp.zeros((Bp, Kp), cdtype).at[:B, :K].set(xp)
    wp = weight.astype(cdtype)
    if (Np, Kp) != (N, K):
        wp = jnp.zeros((Np, Kp), cdtype).at[:N, :K].set(wp)
    bp = jnp.zeros((1, Np), jnp.float32).at[0, :N].set(bias.astype(jnp.float32))

    grid = (Bp // tm, Np // tn, Kp // tk)

    out = pl.pallas_call(
        _linear_kernel,
        out_shape=jax.ShapeDtypeStruct((Bp, Np), out_dtype),
        grid_spec=pltpu.PrefetchScalarGridSpec(
            num_scalar_prefetch=0,
            grid=grid,
            in_specs=[
                pl.BlockSpec((tm, tk), lambda i, j, k: (i, k)),   # x row tile
                pl.BlockSpec((tn, tk), lambda i, j, k: (j, k)),   # weight tile (native layout)
                pl.BlockSpec((1, tn), lambda i, j, k: (0, j)),    # bias slice
            ],
            out_specs=pl.BlockSpec((tm, tn), lambda i, j, k: (i, j)),
            scratch_shapes=[pltpu.VMEM((tm, tn), jnp.float32)],
        ),
        compiler_params=pltpu.CompilerParams(
            dimension_semantics=("parallel", "parallel", "arbitrary"),
        ),
    )(xp, wp, bp)

    return out[:B, :N]


def reference_forward(x, weight, bias):
    # Pure-JAX reference of the wrapped linear model (OSTModel just delegates).
    return x @ weight.T + bias[None, :]


if __name__ == "__main__":
    # Deterministic parameter / input construction (synthetic, no checkpoint).
    key = jax.random.PRNGKey(0)

    def make(B, IN, OUT, k):
        kx, kw, kb = jax.random.split(k, 3)
        bound = 1.0 / (IN ** 0.5)
        x = jax.random.normal(kx, (B, IN), dtype=jnp.float32)
        w = jax.random.uniform(kw, (OUT, IN), minval=-bound, maxval=bound,
                               dtype=jnp.float32)
        b = jax.random.uniform(kb, (OUT,), minval=-bound, maxval=bound,
                               dtype=jnp.float32)
        return x, w, b

    k1, k2, k3 = jax.random.split(key, 3)

    # (1) Main Pallas path: 3-D tiled grid, MXU-sized tiles, f32 accumulation.
    x, w, b = make(256, 384, 512, k1)
    out = jax.block_until_ready(ost_model_forward(x, w, b, force_pallas=True))
    ref = reference_forward(x, w, b)
    assert out.shape == ref.shape
    assert jnp.allclose(out, ref, atol=2e-4, rtol=2e-4), "mismatch (f32 path)"

    # (2) Ragged shapes exercise the pad-to-tile / slice-off path.
    x, w, b = make(130, 200, 96, k2)
    out = jax.block_until_ready(ost_model_forward(x, w, b, force_pallas=True))
    ref = reference_forward(x, w, b)
    assert jnp.allclose(out, ref, atol=2e-4, rtol=2e-4), "mismatch (ragged path)"

    # (3) bf16 operands with f32 accumulation (v6e/v7x MXU fast path).
    x, w, b = make(256, 256, 256, k3)
    out = jax.block_until_ready(
        ost_model_forward(x, w, b, force_pallas=True, use_bf16=True))
    ref = reference_forward(x, w, b)
    assert jnp.allclose(out, ref, atol=5e-2, rtol=5e-2), "mismatch (bf16 path)"

    # (4) Tiny problem dispatches to the fused XLA dot (no kernel overhead).
    x, w, b = make(8, 32, 64, k1)
    out = jax.block_until_ready(ost_model_forward(x, w, b))
    ref = reference_forward(x, w, b)
    assert jnp.allclose(out, ref, atol=1e-5, rtol=1e-5), "mismatch (tiny path)"

    # TODO(synk): OSTModel accepts any `linear_model`; only the nn.Linear case
    # is materialized here since __init__ gives no other structure.
    print("KERNEL_OK")
</pallas_src>

<mosaic_0001>
module attributes {stable_mosaic.version = 11 : i64} {
  func.func @_linear_kernel(%arg0: i32, %arg1: i32, %arg2: i32, %arg3: memref<128x256xf32, #tpu.memory_space<vmem>>, %arg4: memref<128x256xf32, #tpu.memory_space<vmem>>, %arg5: memref<1x128xf32, #tpu.memory_space<vmem>>, %arg6: memref<128x128xf32, #tpu.memory_space<vmem>>, %arg7: memref<128x128xf32, #tpu.memory_space<vmem>>) attributes {dimension_semantics = [#tpu.dimension_semantics<parallel>, #tpu.dimension_semantics<parallel>, #tpu.dimension_semantics<arbitrary>], iteration_bounds = array<i64: 2, 4, 2>, scalar_prefetch = 0 : i64, scratch_operands = 1 : i64, tpu.core_type = #tpu.core_type<tc>, window_params = [{transform_indices = @transform_0, window_bounds = array<i64: 128, 256>}, {transform_indices = @transform_1, window_bounds = array<i64: 128, 256>}, {transform_indices = @transform_2, window_bounds = array<i64: 1, 128>}, {transform_indices = @transform_3, window_bounds = array<i64: 128, 128>}]} {
    %c0_i32 = arith.constant 0 : i32
    %0 = arith.cmpi eq, %arg2, %c0_i32 : i32
    %1 = arith.extui %0 : i1 to i32
    %c0_i32_0 = arith.constant 0 : i32
    %2 = arith.cmpi ne, %1, %c0_i32_0 : i32
    scf.if %2 {
      %cst_9 = arith.constant 0.000000e+00 : f32
      %12 = vector.broadcast %cst_9 : f32 to vector<128x128xf32>
      %c0_10 = arith.constant 0 : index
      %c0_11 = arith.constant 0 : index
      %13 = vector.load %arg7[%c0_10, %c0_11] : memref<128x128xf32, #tpu.memory_space<vmem>>, vector<128x128xf32>
      tpu.vector_store %arg7[%c0_10, %c0_11], %12 {strides = array<i32>} : memref<128x128xf32, #tpu.memory_space<vmem>>, vector<128x128xf32>,
    } else {
    }
    %c0 = arith.constant 0 : index
    %c0_1 = arith.constant 0 : index
    %3 = vector.load %arg7[%c0, %c0_1] : memref<128x128xf32, #tpu.memory_space<vmem>>, vector<128x128xf32>
    %c0_2 = arith.constant 0 : index
    %c0_3 = arith.constant 0 : index
    %4 = vector.load %arg3[%c0_2, %c0_3] : memref<128x256xf32, #tpu.memory_space<vmem>>, vector<128x256xf32>
    %c0_4 = arith.constant 0 : index
    %c0_5 = arith.constant 0 : index
    %5 = vector.load %arg4[%c0_4, %c0_5] : memref<128x256xf32, #tpu.memory_space<vmem>>, vector<128x256xf32>
    %cst = arith.constant dense<0.000000e+00> : vector<128x128xf32>
    %6 = tpu.matmul %4, %5, %cst {dimension_numbers = #tpu.dot_dimension_numbers<[1], [1], [0], [0], [0, 0, 1, 0], [], []>} : vector<128x256xf32>, vector<128x256xf32>, vector<128x128xf32> -> vector<128x128xf32>
    %7 = arith.addf %3, %6 : vector<128x128xf32>
    %c0_6 = arith.constant 0 : index
    %c0_7 = arith.constant 0 : index
    %8 = vector.load %arg7[%c0_6, %c0_7] : memref<128x128xf32, #tpu.memory_space<vmem>>, vector<128x128xf32>
    tpu.vector_store %arg7[%c0_6, %c0_7], %7 {strides = array<i32>} : memref<128x128xf32, #tpu.memory_space<vmem>>, vector<128x128xf32>,
    %c1_i32 = arith.constant 1 : i32
    %9 = arith.cmpi eq, %arg2, %c1_i32 : i32
    %10 = arith.extui %9 : i1 to i32
    %c0_i32_8 = arith.constant 0 : i32
    %11 = arith.cmpi ne, %10, %c0_i32_8 : i32
    scf.if %11 {
      %c0_9 = arith.constant 0 : index
      %c0_10 = arith.constant 0 : index
      %12 = vector.load %arg7[%c0_9, %c0_10] : memref<128x128xf32, #tpu.memory_space<vmem>>, vector<128x128xf32>
      %c0_11 = arith.constant 0 : index
      %c0_12 = arith.constant 0 : index
      %13 = vector.load %arg5[%c0_11, %c0_12] : memref<1x128xf32, #tpu.memory_space<vmem>>, vector<1x128xf32>
      %14 = vector.broadcast %13 : vector<1x128xf32> to vector<128x128xf32>
      %15 = arith.addf %12, %14 : vector<128x128xf32>
      %c0_13 = arith.constant 0 : index
      %c0_14 = arith.constant 0 : index
      %16 = vector.load %arg6[%c0_13, %c0_14] : memref<128x128xf32, #tpu.memory_space<vmem>>, vector<128x128xf32>
      tpu.vector_store %arg6[%c0_13, %c0_14], %15 {strides = array<i32>} : memref<128x128xf32, #tpu.memory_space<vmem>>, vector<128x128xf32>,
    } else {
    }
    return
  }
  func.func @transform_0(%arg0: i32, %arg1: i32, %arg2: i32) -> (i32, i32) {
    %c0_i32 = arith.constant 0 : i32
    return %arg0, %arg2 : i32, i32
  }
  func.func @transform_1(%arg0: i32, %arg1: i32, %arg2: i32) -> (i32, i32) {
    %c0_i32 = arith.constant 0 : i32
    return %arg1, %arg2 : i32, i32
  }
  func.func @transform_2(%arg0: i32, %arg1: i32, %arg2: i32) -> (i32, i32) {
    %c0_i32 = arith.constant 0 : i32
    %c0_i32_0 = arith.constant 0 : i32
    return %c0_i32, %arg1 : i32, i32
  }
  func.func @transform_3(%arg0: i32, %arg1: i32, %arg2: i32) -> (i32, i32) {
    %c0_i32 = arith.constant 0 : i32
    return %arg0, %arg1 : i32, i32
  }
}

</mosaic_0001>

<llo_original>
// kernel: tpu_custom_call.1
$region0: #{tpu_custom_call.1}
  #allocation0 [shape = 'u32[]', space=smem, size = 0x4, offset = 0x4, fixed_abs, tag = 'smem constant byte address 0x4 - core index']
  #allocation1 [shape = 'u32[144,128]{1,0:T(1,128)}', space=vmem, size = 0x12000, scoped, tag = 'internal scratch']
  #allocation2 [shape = 'f32[128,128]{1,0:T(8,128)}', space=vmem, size = 0x10000, scoped, tag = 'scratch operand']
  %s0 = inlined_call_operand.hbm [shape: f32[256,512], index: 0, kind: input, shape index: {}]
  %s1 = inlined_call_operand.hbm [shape: f32[512,512], index: 1, kind: input, shape index: {}]
  %s2 = inlined_call_operand.hbm [shape: f32[1,512], index: 2, kind: input, shape index: {}]
  %s3 = inlined_call_operand.hbm [shape: f32[256,512], index: 3, kind: output, shape index: {}]
  %s4 = sld [smem:[#allocation0]]
  $region65: #{tpu_custom_call.1} parent=0
    _
  %s6 = ssub.s32 1, %s4
  %s7 = scalar_select 0, %s6, %s4
  $region1: #{tpu_custom_call.1} parent=0
    #allocation3 [shape = 'u8[262144]{0}', space=vmem, size = 0x40000, scoped, tag = 'input window, operand 0']
    #allocation4 [shape = 's32[2]{0}', space=sflag, size = 0x8, scoped, tag = 'scoped memory for tpu_custom_call.1']
    #allocation5 [shape = 's32[2]{0}', space=sflag, size = 0x8, scoped, tag = 'scoped memory for tpu_custom_call.1']
    #allocation6 [shape = 'u8[262144]{0}', space=vmem, size = 0x40000, scoped, tag = 'input window, operand 1']
    #allocation7 [shape = 's32[2]{0}', space=sflag, size = 0x8, scoped, tag = 'scoped memory for tpu_custom_call.1']
    #allocation8 [shape = 'u8[1024]{0}', space=vmem, size = 0x400, scoped, tag = 'input window, operand 2']
    #allocation9 [shape = 'u8[131072]{0}', space=vmem, size = 0x20000, scoped, tag = 'output window, operand 0']
    %8 = vsyncpa [#allocation4], 0
    %s9 = scalar_lea.sflag [#allocation4], 1
    %10 = vsyncpa %s9, 0
    %11 = vsyncpa [#allocation7], 0
    %s12 = scalar_lea.sflag [#allocation7], 1
    %13 = vsyncpa %s12, 0
    %14 = vsyncpa [#allocation5], 0
    %s15 = scalar_lea.sflag [#allocation5], 1
    %16 = vsyncpa %s15, 0
    loop: start=0, step=1, limit=18
    $region2: #{tpu_custom_call.1} parent=1 // loop_pre_header
      _
    $region3: #{tpu_custom_call.1} parent=1 // loop_header
      %s18 = sphi 0, %s22
      %p19 = scmp.ge.s32.totalorder %s18, 18
      %s25 = sphi 0, %s44
      %s26 = sphi 0, %s40
      %s27 = sphi 0, %s36
      %s28 = sphi 0, %s25
      %s29 = sphi 0, %s26
      %s30 = sphi 0, %s27
      %s31 = sphi 0, %s28
      %s32 = sphi 0, %s29
      %s33 = sphi 0, %s30
      %s49 = sphi 0, %s51
      %s52 = sphi 0, %s49
      %s53 = sphi 0, %s52
      %s69 = sphi 0, %s53
      %s77 = sphi 0, %s79
      %s80 = sphi 0, %s77
      %s81 = sphi 0, %s80
      %s97 = sphi 0, %s81
      %s103 = sphi 0, %s105
      %s106 = sphi 0, %s103
      %s107 = sphi 0, %s106
      %s123 = sphi 0, %s107
      %s131 = sphi 0, %s133
      %s134 = sphi 0, %s131
      %s135 = sphi 0, %s134
      %s151 = sphi 0, %s135
    $region4: #{tpu_custom_call.1} parent=1 // loop_header_branch
      %21 = sbr.rel (%p19) target = $region8
    $region5: #{tpu_custom_call.1} parent=1 // loop_body
      %s23 = ssub.s32 %s18, 1
      %s24 = ssub.s32 %s18, 2
      %s34 = sadd.s32 1, %s27
      %p35 = scmp.ge.s32.totalorder %s34, 2
      %s36 = scalar_select %p35, 0, %s34
      %s37 = sadd.s32 1, %s26
      %s38 = scalar_select %p35, %s37, %s26
      %p39 = scmp.ge.s32.totalorder %s38, 4
      %s40 = scalar_select %p39, 0, %s38
      %s41 = sadd.s32 1, %s25
      %s42 = scalar_select %p39, %s41, %s25
      %p43 = scmp.ge.s32.totalorder %s42, 2
      %s44 = scalar_select %p43, 0, %s42
      %s45 = ssub.s32 %s25, %s44
      %s46 = ssub.s32 %s27, %s36
      %s47 = sor.u32 %s45, %s46
      %p48 = scmp.eq.s32.totalorder %s47, 0
      %s50 = sadd.s32 %s49, 1
      %s51 = scalar_select %p48, %s49, %s50
      %p54 = pneg %p48
      %p55 = scmp.eq.s32.totalorder %s18, 15
      %p56 = por %p54, %p55
      %p57 = scmp.ne.s32.totalorder %s49, %s52
      %p58 = scmp.eq.s32.totalorder %s18, 0
      %p59 = por %p57, %p58
      %p60 = scmp.ne.s32.totalorder %s49, %s52
      %p61 = scmp.eq.s32.totalorder %s23, 15
      %p62 = por %p60, %p61
      %p63 = scmp.ne.s32.totalorder %s52, %s53
      %p64 = scmp.eq.s32.totalorder %s23, 0
      %p65 = por %p63, %p64
      %p66 = scmp.ne.s32.totalorder %s52, %s53
      %p67 = scmp.eq.s32.totalorder %s24, 15
      %p68 = por %p66, %p67
      %p70 = scmp.ne.s32.totalorder %s53, %s69
      %p71 = scmp.eq.s32.totalorder %s24, 0
      %p72 = por %p70, %p71
      %s73 = ssub.s32 %s26, %s40
      %s74 = ssub.s32 %s27, %s36
      %s75 = sor.u32 %s73, %s74
      %p76 = scmp.eq.s32.totalorder %s75, 0
      %s78 = sadd.s32 %s77, 1
      %s79 = scalar_select %p76, %s77, %s78
      %p82 = pneg %p76
      %p83 = scmp.eq.s32.totalorder %s18, 15
      %p84 = por %p82, %p83
      %p85 = scmp.ne.s32.totalorder %s77, %s80
      %p86 = scmp.eq.s32.totalorder %s18, 0
      %p87 = por %p85, %p86
      %p88 = scmp.ne.s32.totalorder %s77, %s80
      %p89 = scmp.eq.s32.totalorder %s23, 15
      %p90 = por %p88, %p89
      %p91 = scmp.ne.s32.totalorder %s80, %s81
      %p92 = scmp.eq.s32.totalorder %s23, 0
      %p93 = por %p91, %p92
      %p94 = scmp.ne.s32.totalorder %s80, %s81
      %p95 = scmp.eq.s32.totalorder %s24, 15
      %p96 = por %p94, %p95
      %p98 = scmp.ne.s32.totalorder %s81, %s97
      %p99 = scmp.eq.s32.totalorder %s24, 0
      %p100 = por %p98, %p99
      %s101 = ssub.s32 %s26, %s40
      %p102 = scmp.eq.s32.totalorder %s101, 0
      %s104 = sadd.s32 %s103, 1
      %s105 = scalar_select %p102, %s103, %s104
      %p108 = pneg %p102
      %p109 = scmp.eq.s32.totalorder %s18, 15
      %p110 = por %p108, %p109
      %p111 = scmp.ne.s32.totalorder %s103, %s106
      %p112 = scmp.eq.s32.totalorder %s18, 0
      %p113 = por %p111, %p112
      %p114 = scmp.ne.s32.totalorder %s103, %s106
      %p115 = scmp.eq.s32.totalorder %s23, 15
      %p116 = por %p114, %p115
      %p117 = scmp.ne.s32.totalorder %s106, %s107
      %p118 = scmp.eq.s32.totalorder %s23, 0
      %p119 = por %p117, %p118
      %p120 = scmp.ne.s32.totalorder %s106, %s107
      %p121 = scmp.eq.s32.totalorder %s24, 15
      %p122 = por %p120, %p121
      %p124 = scmp.ne.s32.totalorder %s107, %s123
      %p125 = scmp.eq.s32.totalorder %s24, 0
      %p126 = por %p124, %p125
      %s127 = ssub.s32 %s25, %s44
      %s128 = ssub.s32 %s26, %s40
      %s129 = sor.u32 %s127, %s128
      %p130 = scmp.eq.s32.totalorder %s129, 0
      %s132 = sadd.s32 %s131, 1
      %s133 = scalar_select %p130, %s131, %s132
      %p136 = pneg %p130
      %p137 = scmp.eq.s32.totalorder %s18, 15
      %p138 = por %p136, %p137
      %p139 = scmp.ne.s32.totalorder %s131, %s134
      %p140 = scmp.eq.s32.totalorder %s18, 0
      %p141 = por %p139, %p140
      %p142 = scmp.ne.s32.totalorder %s131, %s134
      %p143 = scmp.eq.s32.totalorder %s23, 15
      %p144 = por %p142, %p143
      %p145 = scmp.ne.s32.totalorder %s134, %s135
      %p146 = scmp.eq.s32.totalorder %s23, 0
      %p147 = por %p145, %p146
      %p148 = scmp.ne.s32.totalorder %s134, %s135
      %p149 = scmp.eq.s32.totalorder %s24, 15
      %p150 = por %p148, %p149
      %p152 = scmp.ne.s32.totalorder %s135, %s151
      %p153 = scmp.eq.s32.totalorder %s24, 0
      %p154 = por %p152, %p153
      %p155 = scmp.le.s32.totalorder 1, %s18
      %p156 = scmp.lt.s32.totalorder %s18, 17
      %p157 = pnand %p155, %p156
      %p158 = pneg %p157
      // Predicated region
      $region9: #{tpu_custom_call.1} parent=5 // pred_check
        _
      $region10: #{tpu_custom_call.1} parent=5 // pred_check_branch
        %160 = sbr.rel (%p157) target = $region12
      $region11: #{tpu_custom_call.1} parent=5 // pred_region
        %s161 = ssub.s32 %s18, 1
      $region12: #{tpu_custom_call.1} parent=5 // pred_fallthru
        _
      %p162 = scmp.lt.s32.totalorder %s18, 16
      // Predicated region
      $region13: #{tpu_custom_call.1} parent=5 // pred_check
        %p163 = pneg %p162
      $region14: #{tpu_custom_call.1} parent=5 // pred_check_branch
        %165 = sbr.rel (%p163) target = $region16
      $region15: #{tpu_custom_call.1} parent=5 // pred_region
        // Predicated region
        $region17: #{tpu_custom_call.1} parent=15 // pred_check
          %p166 = pneg %p59
        $region18: #{tpu_custom_call.1} parent=15 // pred_check_branch
          %168 = sbr.rel (%p166) target = $region20
        $region19: #{tpu_custom_call.1} parent=15 // pred_region
          %s169 = sand.u32 %s49, 1
          %s170 = scalar_lea.sflag [#allocation4], %s169
          %s171 = sand.u32 %s49, 1
          %s172 = smul.addr %s171, 256
          %s173 = scalar_lea.vmem [#allocation3], %s172
          %s174 = smul.u32 16, %s25
          %s175 = smul.u32 2, %s27
          %s177 = ssub.s32 4096, 4096
          %178 = vsyncadd %s170, %s177
          %s179 = smul.addr %s174, 4
          %s180 = sadd.s32 %s175, %s179
          %s181 = smul.addr %s180, 128
          %s182 = scalar_lea.hbm %s0, %s181
          %s183 = sshll.u32 %s173, 4
          %s184 = int_to_ptr.vmem [resolvable:$true] %s183
          %189 = dma.hbm_to_vmem [thread:$0]  %s182, 4096, %s184, %s170, 512, 256, 16
        $region20: #{tpu_custom_call.1} parent=15 // pred_fallthru
          _
        // Predicated region
        $region21: #{tpu_custom_call.1} parent=15 // pred_check
          %p190 = pneg %p87
        $region22: #{tpu_custom_call.1} parent=15 // pred_check_branch
          %192 = sbr.rel (%p190) target = $region24
        $region23: #{tpu_custom_call.1} parent=15 // pred_region
          %s193 = sand.u32 %s18, 1
          %s194 = scalar_lea.sflag [#allocation7], %s193
          %s195 = sand.u32 %s77, 1
          %s196 = smul.addr %s195, 256
          %s197 = scalar_lea.vmem [#allocation6], %s196
          %s198 = smul.u32 16, %s26
          %s199 = smul.u32 2, %s27
          %s201 = ssub.s32 4096, 4096
          %202 = vsyncadd %s194, %s201
          %s203 = smul.addr %s198, 4
          %s204 = sadd.s32 %s199, %s203
          %s205 = smul.addr %s204, 128
          %s206 = scalar_lea.hbm %s1, %s205
          %s207 = sshll.u32 %s197, 4
          %s208 = int_to_ptr.vmem [resolvable:$true] %s207
          %213 = dma.hbm_to_vmem [thread:$0]  %s206, 4096, %s208, %s194, 512, 256, 16
        $region24: #{tpu_custom_call.1} parent=15 // pred_fallthru
          _
        // Predicated region
        $region25: #{tpu_custom_call.1} parent=15 // pred_check
          %p214 = pneg %p113
        $region26: #{tpu_custom_call.1} parent=15 // pred_check_branch
          %216 = sbr.rel (%p214) target = $region28
        $region27: #{tpu_custom_call.1} parent=15 // pred_region
          %s217 = sand.u32 %s18, 1
          %s218 = scalar_lea.sflag [#allocation7], %s217
          %s219 = sand.u32 %s103, 1
          %s220 = scalar_lea.vmem [#allocation8], %s219
          %s222 = ssub.s32 16, 16
          %223 = vsyncadd %s218, %s222
          %s224 = smul.addr %s26, 16
          %s225 = scalar_lea.hbm %s2, %s224
          %s227 = sshll.u32 %s220, 4
          %s228 = int_to_ptr.vmem [resolvable:$true] %s227
          %230 = dma.hbm_to_vmem [thread:$0]  %s225, 16, %s228, %s218
        $region28: #{tpu_custom_call.1} parent=15 // pred_fallthru
          _
      $region16: #{tpu_custom_call.1} parent=5 // pred_fallthru
        _
      %p231 = scmp.le.s32.totalorder 1, %s18
      %p232 = scmp.lt.s32.totalorder %s18, 17
      %p233 = pnand %p231, %p232
      %p234 = pneg %p233
      // Predicated region
      $region29: #{tpu_custom_call.1} parent=5 // pred_check
        _
      $region30: #{tpu_custom_call.1} parent=5 // pred_check_branch
        %236 = sbr.rel (%p233) target = $region32
      $region31: #{tpu_custom_call.1} parent=5 // pred_region
        %s237 = ssub.s32 %s18, 1
        %s238 = sand.u32 %s52, 1
        %s239 = scalar_lea.sflag [#allocation4], %s238
        %s240 = sand.u32 %s52, 1
        %s241 = smul.addr %s240, 256
        %s242 = scalar_lea.vmem [#allocation3], %s241
        // Predicated region
        $region33: #{tpu_custom_call.1} parent=31 // pred_check
          %p243 = pneg %p65
        $region34: #{tpu_custom_call.1} parent=31 // pred_check_branch
          %245 = sbr.rel (%p243) target = $region36
        $region35: #{tpu_custom_call.1} parent=31 // pred_region
          %246 = dma.done %s239, 4096
        $region36: #{tpu_custom_call.1} parent=31 // pred_fallthru
          _
        %s247 = sand.u32 %s23, 1
        %s248 = scalar_lea.sflag [#allocation7], %s247
        %s249 = sand.u32 %s80, 1
        %s250 = smul.addr %s249, 256
        %s251 = scalar_lea.vmem [#allocation6], %s250
        // Predicated region
        $region37: #{tpu_custom_call.1} parent=31 // pred_check
          %p252 = pneg %p93
        $region38: #{tpu_custom_call.1} parent=31 // pred_check_branch
          %254 = sbr.rel (%p252) target = $region40
        $region39: #{tpu_custom_call.1} parent=31 // pred_region
          %255 = dma.done %s248, 4096
        $region40: #{tpu_custom_call.1} parent=31 // pred_fallthru
          _
        %s256 = sand.u32 %s23, 1
        %s257 = scalar_lea.sflag [#allocation7], %s256
        %s258 = sand.u32 %s106, 1
        %s259 = scalar_lea.vmem [#allocation8], %s258
        // Predicated region
        $region41: #{tpu_custom_call.1} parent=31 // pred_check
          %p260 = pneg %p119
        $region42: #{tpu_custom_call.1} parent=31 // pred_check_branch
          %262 = sbr.rel (%p260) target = $region44
        $region43: #{tpu_custom_call.1} parent=31 // pred_region
          %263 = dma.done %s257, 16
        $region44: #{tpu_custom_call.1} parent=31 // pred_fallthru
          _
        %s264 = sand.u32 %s52, 1
        %s265 = scalar_lea.sflag [#allocation4], %s264
        %s266 = sand.u32 %s52, 1
        %s267 = smul.addr %s266, 256
        %s268 = scalar_lea.vmem [#allocation3], %s267
        %p269 = pneg %p65
        %p270 = pneg %p62
        %s271 = sand.u32 %s23, 1
        %s272 = scalar_lea.sflag [#allocation7], %s271
        %s273 = sand.u32 %s80, 1
        %s274 = smul.addr %s273, 256
        %s275 = scalar_lea.vmem [#allocation6], %s274
        %p276 = pneg %p93
        %p277 = pneg %p90
        %s278 = sand.u32 %s23, 1
        %s279 = scalar_lea.sflag [#allocation7], %s278
        %s280 = sand.u32 %s106, 1
        %s281 = scalar_lea.vmem [#allocation8], %s280
        %p282 = pneg %p119
        %p283 = pneg %p116
        %p284 = pneg %p147
        %p285 = pneg %p144
        %s286 = sand.u32 %s134, 1
        %s287 = scalar_lea.sflag [#allocation5], %s286
        %s288 = sand.u32 %s134, 1
        %s289 = smul.addr %s288, 128
        %s290 = scalar_lea.vmem [#allocation9], %s289
        %s291 = smul.u32 16, %s28
        %s292 = smul.u32 2, %s30
        %s293 = smul.u32 16, %s29
        %s294 = smul.u32 2, %s30
        %s295 = smul.u32 16, %s28
        %p296 = scmp.eq.s32.totalorder %s30, 0
        // Predicated region
        $region45: #{tpu_custom_call.1} parent=31 // pred_check
          %p297 = pneg %p296
        $region46: #{tpu_custom_call.1} parent=31 // pred_check_branch
          %299 = sbr.rel (%p297) target = $region48
        $region47: #{tpu_custom_call.1} parent=31 // pred_region
          %300 = vst [vmem:[#allocation2] sm:$0xff] 0.0
          %301 = vst [vmem:[#allocation2 + $0x8] sm:$0xff] 0.0
          %302 = vst [vmem:[#allocation2 + $0x10] sm:$0xff] 0.0
          %303 = vst [vmem:[#allocation2 + $0x18] sm:$0xff] 0.0
          %304 = vst [vmem:[#allocation2 + $0x20] sm:$0xff] 0.0
          %305 = vst [vmem:[#allocation2 + $0x28] sm:$0xff] 0.0
          %306 = vst [vmem:[#allocation2 + $0x30] sm:$0xff] 0.0
          %307 = vst [vmem:[#allocation2 + $0x38] sm:$0xff] 0.0
          %308 = vst [vmem:[#allocation2 + $0x40] sm:$0xff] 0.0
          %309 = vst [vmem:[#allocation2 + $0x48] sm:$0xff] 0.0
          %310 = vst [vmem:[#allocation2 + $0x50] sm:$0xff] 0.0
          %311 = vst [vmem:[#allocation2 + $0x58] sm:$0xff] 0.0
          %312 = vst [vmem:[#allocation2 + $0x60] sm:$0xff] 0.0
          %313 = vst [vmem:[#allocation2 + $0x68] sm:$0xff] 0.0
          %314 = vst [vmem:[#allocation2 + $0x70] sm:$0xff] 0.0
          %315 = vst [vmem:[#allocation2 + $0x78] sm:$0xff] 0.0
        $region48: #{tpu_custom_call.1} parent=31 // pred_fallthru
          _
        %v316 = vld [vmem:[#allocation2] sm:$0xff]
        %v317 = vld [vmem:[#allocation2 + $0x8] sm:$0xff]
        %v318 = vld [vmem:[#allocation2 + $0x10] sm:$0xff]
        %v319 = vld [vmem:[#allocation2 + $0x18] sm:$0xff]
        %v320 = vld [vmem:[#allocation2 + $0x20] sm:$0xff]
        %v321 = vld [vmem:[#allocation2 + $0x28] sm:$0xff]
        %v322 = vld [vmem:[#allocation2 + $0x30] sm:$0xff]
        %v323 = vld [vmem:[#allocation2 + $0x38] sm:$0xff]
        %v324 = vld [vmem:[#allocation2 + $0x40] sm:$0xff]
        %v325 = vld [vmem:[#allocation2 + $0x48] sm:$0xff]
        %v326 = vld [vmem:[#allocation2 + $0x50] sm:$0xff]
        %v327 = vld [vmem:[#allocation2 + $0x58] sm:$0xff]
        %v328 = vld [vmem:[#allocation2 + $0x60] sm:$0xff]
        %v329 = vld [vmem:[#allocation2 + $0x68] sm:$0xff]
        %v330 = vld [vmem:[#allocation2 + $0x70] sm:$0xff]
        %v331 = vld [vmem:[#allocation2 + $0x78] sm:$0xff]
        %v332 = vld [vmem:[%s242] sm:$0xff]
        %v333 = vld [vmem:[%s242 + $0x8] sm:$0xff]
        %v334 = vld [vmem:[%s242 + $0x10] sm:$0xff]
        %v335 = vld [vmem:[%s242 + $0x18] sm:$0xff]
        %v336 = vld [vmem:[%s242 + $0x20] sm:$0xff]
        %v337 = vld [vmem:[%s242 + $0x28] sm:$0xff]
        %v338 = vld [vmem:[%s242 + $0x30] sm:$0xff]
        %v339 = vld [vmem:[%s242 + $0x38] sm:$0xff]
        %v340 = vld [vmem:[%s242 + $0x40] sm:$0xff]
        %v341 = vld [vmem:[%s242 + $0x48] sm:$0xff]
        %v342 = vld [vmem:[%s242 + $0x50] sm:$0xff]
        %v343 = vld [vmem:[%s242 + $0x58] sm:$0xff]
        %v344 = vld [vmem:[%s242 + $0x60] sm:$0xff]
        %v345 = vld [vmem:[%s242 + $0x68] sm:$0xff]
        %v346 = vld [vmem:[%s242 + $0x70] sm:$0xff]
        %v347 = vld [vmem:[%s242 + $0x78] sm:$0xff]
        %v348 = vld [vmem:[%s242 + $0x80] sm:$0xff]
        %v349 = vld [vmem:[%s242 + $0x88] sm:$0xff]
        %v350 = vld [vmem:[%s242 + $0x90] sm:$0xff]
        %v351 = vld [vmem:[%s242 + $0x98] sm:$0xff]
        %v352 = vld [vmem:[%s242 + $0xa0] sm:$0xff]
        %v353 = vld [vmem:[%s242 + $0xa8] sm:$0xff]
        %v354 = vld [vmem:[%s242 + $0xb0] sm:$0xff]
        %v355 = vld [vmem:[%s242 + $0xb8] sm:$0xff]
        %v356 = vld [vmem:[%s242 + $0xc0] sm:$0xff]
        %v357 = vld [vmem:[%s242 + $0xc8] sm:$0xff]
        %v358 = vld [vmem:[%s242 + $0xd0] sm:$0xff]
        %v359 = vld [vmem:[%s242 + $0xd8] sm:$0xff]
        %v360 = vld [vmem:[%s242 + $0xe0] sm:$0xff]
        %v361 = vld [vmem:[%s242 + $0xe8] sm:$0xff]
        %v362 = vld [vmem:[%s242 + $0xf0] sm:$0xff]
        %v363 = vld [vmem:[%s242 + $0xf8] sm:$0xff]
        %v364 = vld [vmem:[%s251] sm:$0xff]
        %v365 = vld [vmem:[%s251 + $0x8] sm:$0xff]
        %v366 = vld [vmem:[%s251 + $0x10] sm:$0xff]
        %v367 = vld [vmem:[%s251 + $0x18] sm:$0xff]
        %v368 = vld [vmem:[%s251 + $0x20] sm:$0xff]
        %v369 = vld [vmem:[%s251 + $0x28] sm:$0xff]
        %v370 = vld [vmem:[%s251 + $0x30] sm:$0xff]
        %v371 = vld [vmem:[%s251 + $0x38] sm:$0xff]
        %v372 = vld [vmem:[%s251 + $0x40] sm:$0xff]
        %v373 = vld [vmem:[%s251 + $0x48] sm:$0xff]
        %v374 = vld [vmem:[%s251 + $0x50] sm:$0xff]
        %v375 = vld [vmem:[%s251 + $0x58] sm:$0xff]
        %v376 = vld [vmem:[%s251 + $0x60] sm:$0xff]
        %v377 = vld [vmem:[%s251 + $0x68] sm:$0xff]
        %v378 = vld [vmem:[%s251 + $0x70] sm:$0xff]
        %v379 = vld [vmem:[%s251 + $0x78] sm:$0xff]
        %v380 = vld [vmem:[%s251 + $0x80] sm:$0xff]
        %v381 = vld [vmem:[%s251 + $0x88] sm:$0xff]
        %v382 = vld [vmem:[%s251 + $0x90] sm:$0xff]
        %v383 = vld [vmem:[%s251 + $0x98] sm:$0xff]
        %v384 = vld [vmem:[%s251 + $0xa0] sm:$0xff]
        %v385 = vld [vmem:[%s251 + $0xa8] sm:$0xff]
        %v386 = vld [vmem:[%s251 + $0xb0] sm:$0xff]
        %v387 = vld [vmem:[%s251 + $0xb8] sm:$0xff]
        %v388 = vld [vmem:[%s251 + $0xc0] sm:$0xff]
        %v389 = vld [vmem:[%s251 + $0xc8] sm:$0xff]
        %v390 = vld [vmem:[%s251 + $0xd0] sm:$0xff]
        %v391 = vld [vmem:[%s251 + $0xd8] sm:$0xff]
        %v392 = vld [vmem:[%s251 + $0xe0] sm:$0xff]
        %v393 = vld [vmem:[%s251 + $0xe8] sm:$0xff]
        %v394 = vld [vmem:[%s251 + $0xf0] sm:$0xff]
        %v395 = vld [vmem:[%s251 + $0xf8] sm:$0xff]
        %396 = vmatprep.subr.mxu0 %v395
        %397 = vmatpush1.xpose.msra.mxu0 %v394
        %398 = vmatprep.subr.mxu0 %v393
        %399 = vmatpush1.xpose.msra.mxu0 %v392
        %400 = vmatprep.subr.mxu0 %v391
        %401 = vmatpush1.xpose.msra.mxu0 %v390
        %402 = vmatprep.subr.mxu0 %v389
        %403 = vmatpush1.xpose.msra.mxu0 %v388
        %404 = vmatprep.subr.mxu0 %v387
        %405 = vmatpush1.xpose.msra.mxu0 %v386
        %406 = vmatprep.subr.mxu0 %v385
        %407 = vmatpush1.xpose.msra.mxu0 %v384
        %408 = vmatprep.subr.mxu0 %v383
        %409 = vmatpush1.xpose.msra.mxu0 %v382
        %410 = vmatprep.subr.mxu0 %v381
        %411 = vmatpush1.xpose.msra.mxu0 %v380
        %412 = vmatprep.subr.mxu0 %v379
        %413 = vmatpush1.xpose.msra.mxu0 %v378
        %414 = vmatprep.subr.mxu0 %v377
        %415 = vmatpush1.xpose.msra.mxu0 %v376
        %416 = vmatprep.subr.mxu0 %v375
        %417 = vmatpush1.xpose.msra.mxu0 %v374
        %418 = vmatprep.subr.mxu0 %v373
        %419 = vmatpush1.xpose.msra.mxu0 %v372
        %420 = vmatprep.subr.mxu0 %v371
        %421 = vmatpush1.xpose.msra.mxu0 %v370
        %422 = vmatprep.subr.mxu0 %v369
        %423 = vmatpush1.xpose.msra.mxu0 %v368
        %424 = vmatprep.subr.mxu0 %v367
        %425 = vmatpush1.xpose.msra.mxu0 %v366
        %426 = vmatprep.subr.mxu0 %v365
        %427 = vmatpush1.xpose.msra.mxu0 %v364
        %428 = vmatprep.subr.mxu0 0.0
        %429 = vmatpush2.xpose.msra.mxu0 0.0
        %430 = vmatprep.subr.mxu0 0.0
        %431 = vmatpush2.xpose.msra.mxu0 0.0
        %432 = vmatprep.subr.mxu0 0.0
        %433 = vmatpush2.xpose.msra.mxu0 0.0
        %434 = vmatprep.subr.mxu0 0.0
        %435 = vmatpush2.xpose.msra.mxu0 0.0
        %436 = vmatprep.subr.mxu0 0.0
        %437 = vmatpush2.xpose.msra.mxu0 0.0
        %438 = vmatprep.subr.mxu0 0.0
        %439 = vmatpush2.xpose.msra.mxu0 0.0
        %440 = vmatprep.subr.mxu0 0.0
        %441 = vmatpush2.xpose.msra.mxu0 0.0
        %442 = vmatprep.subr.mxu0 0.0
        %443 = vmatpush2.xpose.msra.mxu0 0.0
        %444 = vmatprep.subr.mxu0 0.0
        %445 = vmatpush2.xpose.msra.mxu0 0.0
        %446 = vmatprep.subr.mxu0 0.0
        %447 = vmatpush2.xpose.msra.mxu0 0.0
        %448 = vmatprep.subr.mxu0 0.0
        %449 = vmatpush2.xpose.msra.mxu0 0.0
        %450 = vmatprep.subr.mxu0 0.0
        %451 = vmatpush2.xpose.msra.mxu0 0.0
        %452 = vmatprep.subr.mxu0 0.0
        %453 = vmatpush2.xpose.msra.mxu0 0.0
        %454 = vmatprep.subr.mxu0 0.0
        %455 = vmatpush2.xpose.msra.mxu0 0.0
        %456 = vmatprep.subr.mxu0 0.0
        %457 = vmatpush2.xpose.msra.mxu0 0.0
        %458 = vmatprep.subr.mxu0 0.0
        %459 = vmatpush2.xpose.msra.mxu0 0.0
        %460 = vmatprep.mubr.f32.mxu0 %v333
        %461 = vmatmul.mubr.f32.gmra.mxu0 %v332
        %v462 = vpop.f32.mrf.mxu0
        %v463 = vadd.f32 0.0, %v462
        %v464 = vpop.f32.mrf.mxu0
        %465 = vmatprep.mubr.f32.mxu0 %v335
        %466 = vmatmul.mubr.f32.gmra.mxu0 %v334
        %v467 = vpop.f32.mrf.mxu0
        %v468 = vadd.f32 0.0, %v467
        %v469 = vpop.f32.mrf.mxu0
        %470 = vmatprep.mubr.f32.mxu0 %v337
        %471 = vmatmul.mubr.f32.gmra.mxu0 %v336
        %v472 = vpop.f32.mrf.mxu0
        %v473 = vadd.f32 0.0, %v472
        %v474 = vpop.f32.mrf.mxu0
        %475 = vmatprep.mubr.f32.mxu0 %v339
        %476 = vmatmul.mubr.f32.gmra.mxu0 %v338
        %v477 = vpop.f32.mrf.mxu0
        %v478 = vadd.f32 0.0, %v477
        %v479 = vpop.f32.mrf.mxu0
        %480 = vmatprep.mubr.f32.mxu0 %v341
        %481 = vmatmul.mubr.f32.gmra.mxu0 %v340
        %v482 = vpop.f32.mrf.mxu0
        %v483 = vadd.f32 0.0, %v482
        %v484 = vpop.f32.mrf.mxu0
        %485 = vmatprep.mubr.f32.mxu0 %v343
        %486 = vmatmul.mubr.f32.gmra.mxu0 %v342
        %v487 = vpop.f32.mrf.mxu0
        %v488 = vadd.f32 0.0, %v487
        %v489 = vpop.f32.mrf.mxu0
        %490 = vmatprep.mubr.f32.mxu0 %v345
        %491 = vmatmul.mubr.f32.gmra.mxu0 %v344
        %v492 = vpop.f32.mrf.mxu0
        %v493 = vadd.f32 0.0, %v492
        %v494 = vpop.f32.mrf.mxu0
        %495 = vmatprep.mubr.f32.mxu0 %v347
        %496 = vmatmul.mubr.f32.gmra.mxu0 %v346
        %v497 = vpop.f32.mrf.mxu0
        %v498 = vadd.f32 0.0, %v497
        %v499 = vpop.f32.mrf.mxu0
        %500 = vmatprep.mubr.f32.mxu0 %v349
        %501 = vmatmul.mubr.f32.gmra.mxu0 %v348
        %v502 = vpop.f32.mrf.mxu0
        %v503 = vadd.f32 0.0, %v502
        %v504 = vpop.f32.mrf.mxu0
        %505 = vmatprep.mubr.f32.mxu0 %v351
        %506 = vmatmul.mubr.f32.gmra.mxu0 %v350
        %v507 = vpop.f32.mrf.mxu0
        %v508 = vadd.f32 0.0, %v507
        %v509 = vpop.f32.mrf.mxu0
        %510 = vmatprep.mubr.f32.mxu0 %v353
        %511 = vmatmul.mubr.f32.gmra.mxu0 %v352
        %v512 = vpop.f32.mrf.mxu0
        %v513 = vadd.f32 0.0, %v512
        %v514 = vpop.f32.mrf.mxu0
        %515 = vmatprep.mubr.f32.mxu0 %v355
        %516 = vmatmul.mubr.f32.gmra.mxu0 %v354
        %v517 = vpop.f32.mrf.mxu0
        %v518 = vadd.f32 0.0, %v517
        %v519 = vpop.f32.mrf.mxu0
        %520 = vmatprep.mubr.f32.mxu0 %v357
        %521 = vmatmul.mubr.f32.gmra.mxu0 %v356
        %v522 = vpop.f32.mrf.mxu0
        %v523 = vadd.f32 0.0, %v522
        %v524 = vpop.f32.mrf.mxu0
        %525 = vmatprep.mubr.f32.mxu0 %v359
        %526 = vmatmul.mubr.f32.gmra.mxu0 %v358
        %v527 = vpop.f32.mrf.mxu0
        %v528 = vadd.f32 0.0, %v527
        %v529 = vpop.f32.mrf.mxu0
        %530 = vmatprep.mubr.f32.mxu0 %v361
        %531 = vmatmul.mubr.f32.gmra.mxu0 %v360
        %v532 = vpop.f32.mrf.mxu0
        %v533 = vadd.f32 0.0, %v532
        %v534 = vpop.f32.mrf.mxu0
        %535 = vmatprep.mubr.f32.mxu0 %v363
        %536 = vmatmul.mubr.f32.gmra.mxu0 %v362
        %v537 = vpop.f32.mrf.mxu0
        %v538 = vadd.f32 0.0, %v537
        %v539 = vpop.f32.mrf.mxu0
        %540 = vdwg.mxu0
        %v541 = vadd.f32 %v316, %v463
        %v542 = vadd.f32 %v317, %v468
        %v543 = vadd.f32 %v318, %v473
        %v544 = vadd.f32 %v319, %v478
        %v545 = vadd.f32 %v320, %v483
        %v546 = vadd.f32 %v321, %v488
        %v547 = vadd.f32 %v322, %v493
        %v548 = vadd.f32 %v323, %v498
        %v549 = vadd.f32 %v324, %v503
        %v550 = vadd.f32 %v325, %v508
        %v551 = vadd.f32 %v326, %v513
        %v552 = vadd.f32 %v327, %v518
        %v553 = vadd.f32 %v328, %v523
        %v554 = vadd.f32 %v329, %v528
        %v555 = vadd.f32 %v330, %v533
        %v556 = vadd.f32 %v331, %v538
        %557 = vst [vmem:[#allocation2] sm:$0xff] %v541
        %558 = vst [vmem:[#allocation2 + $0x8] sm:$0xff] %v542
        %559 = vst [vmem:[#allocation2 + $0x10] sm:$0xff] %v543
        %560 = vst [vmem:[#allocation2 + $0x18] sm:$0xff] %v544
        %561 = vst [vmem:[#allocation2 + $0x20] sm:$0xff] %v545
        %562 = vst [vmem:[#allocation2 + $0x28] sm:$0xff] %v546
        %563 = vst [vmem:[#allocation2 + $0x30] sm:$0xff] %v547
        %564 = vst [vmem:[#allocation2 + $0x38] sm:$0xff] %v548
        %565 = vst [vmem:[#allocation2 + $0x40] sm:$0xff] %v549
        %566 = vst [vmem:[#allocation2 + $0x48] sm:$0xff] %v550
        %567 = vst [vmem:[#allocation2 + $0x50] sm:$0xff] %v551
        %568 = vst [vmem:[#allocation2 + $0x58] sm:$0xff] %v552
        %569 = vst [vmem:[#allocation2 + $0x60] sm:$0xff] %v553
        %570 = vst [vmem:[#allocation2 + $0x68] sm:$0xff] %v554
        %571 = vst [vmem:[#allocation2 + $0x70] sm:$0xff] %v555
        %572 = vst [vmem:[#allocation2 + $0x78] sm:$0xff] %v556
        %p573 = scmp.eq.s32.totalorder %s30, 1
        // Predicated region
        $region49: #{tpu_custom_call.1} parent=31 // pred_check
          %p574 = pneg %p573
        $region50: #{tpu_custom_call.1} parent=31 // pred_check_branch
          %576 = sbr.rel (%p574) target = $region52
        $region51: #{tpu_custom_call.1} parent=31 // pred_region
          %v577 = vld [vmem:[#allocation2] sm:$0xff]
          %v578 = vld [vmem:[#allocation2 + $0x8] sm:$0xff]
          %v579 = vld [vmem:[#allocation2 + $0x10] sm:$0xff]
          %v580 = vld [vmem:[#allocation2 + $0x18] sm:$0xff]
          %v581 = vld [vmem:[#allocation2 + $0x20] sm:$0xff]
          %v582 = vld [vmem:[#allocation2 + $0x28] sm:$0xff]
          %v583 = vld [vmem:[#allocation2 + $0x30] sm:$0xff]
          %v584 = vld [vmem:[#allocation2 + $0x38] sm:$0xff]
          %v585 = vld [vmem:[#allocation2 + $0x40] sm:$0xff]
          %v586 = vld [vmem:[#allocation2 + $0x48] sm:$0xff]
          %v587 = vld [vmem:[#allocation2 + $0x50] sm:$0xff]
          %v588 = vld [vmem:[#allocation2 + $0x58] sm:$0xff]
          %v589 = vld [vmem:[#allocation2 + $0x60] sm:$0xff]
          %v590 = vld [vmem:[#allocation2 + $0x68] sm:$0xff]
          %v591 = vld [vmem:[#allocation2 + $0x70] sm:$0xff]
          %v592 = vld [vmem:[#allocation2 + $0x78] sm:$0xff]
          %v593 = vld [vmem:[%s259] sm:$0x1]
          %v595 = vlaneseq
          %v596 = vshrl.u32 %v595, 7
          %v597 = vsub.s32 0, %v596
          %v598 = vrot.slane %v593, %v597
          %v600 = vadd.f32 %v577, %v598
          %v601 = vadd.f32 %v578, %v598
          %v602 = vadd.f32 %v579, %v598
          %v603 = vadd.f32 %v580, %v598
          %v604 = vadd.f32 %v581, %v598
          %v605 = vadd.f32 %v582, %v598
          %v606 = vadd.f32 %v583, %v598
          %v607 = vadd.f32 %v584, %v598
          %v608 = vadd.f32 %v585, %v598
          %v609 = vadd.f32 %v586, %v598
          %v610 = vadd.f32 %v587, %v598
          %v611 = vadd.f32 %v588, %v598
          %v612 = vadd.f32 %v589, %v598
          %v613 = vadd.f32 %v590, %v598
          %v614 = vadd.f32 %v591, %v598
          %v615 = vadd.f32 %v592, %v598
          %616 = vst [vmem:[%s290] sm:$0xff] %v600
          %617 = vst [vmem:[%s290 + $0x8] sm:$0xff] %v601
          %618 = vst [vmem:[%s290 + $0x10] sm:$0xff] %v602
          %619 = vst [vmem:[%s290 + $0x18] sm:$0xff] %v603
          %620 = vst [vmem:[%s290 + $0x20] sm:$0xff] %v604
          %621 = vst [vmem:[%s290 + $0x28] sm:$0xff] %v605
          %622 = vst [vmem:[%s290 + $0x30] sm:$0xff] %v606
          %623 = vst [vmem:[%s290 + $0x38] sm:$0xff] %v607
          %624 = vst [vmem:[%s290 + $0x40] sm:$0xff] %v608
          %625 = vst [vmem:[%s290 + $0x48] sm:$0xff] %v609
          %626 = vst [vmem:[%s290 + $0x50] sm:$0xff] %v610
          %627 = vst [vmem:[%s290 + $0x58] sm:$0xff] %v611
          %628 = vst [vmem:[%s290 + $0x60] sm:$0xff] %v612
          %629 = vst [vmem:[%s290 + $0x68] sm:$0xff] %v613
          %630 = vst [vmem:[%s290 + $0x70] sm:$0xff] %v614
          %631 = vst [vmem:[%s290 + $0x78] sm:$0xff] %v615
        $region52: #{tpu_custom_call.1} parent=31 // pred_fallthru
          _
        %s632 = sand.u32 %s134, 1
        %s633 = scalar_lea.sflag [#allocation5], %s632
        %s634 = sand.u32 %s134, 1
        %s635 = smul.addr %s634, 128
        %s636 = scalar_lea.vmem [#allocation9], %s635
        // Predicated region
        $region53: #{tpu_custom_call.1} parent=31 // pred_check
          %p637 = pneg %p144
        $region54: #{tpu_custom_call.1} parent=31 // pred_check_branch
          %639 = sbr.rel (%p637) target = $region56
        $region55: #{tpu_custom_call.1} parent=31 // pred_region
          %s640 = smul.u32 16, %s28
          %s642 = ssub.s32 2048, 2048
          %643 = vsyncadd %s633, %s642
          %s644 = smul.addr %s640, 4
          %s645 = sadd.s32 %s29, %s644
          %s646 = smul.addr %s645, 128
          %s647 = scalar_lea.hbm %s3, %s646
          %s648 = sshll.u32 %s636, 4
          %s649 = int_to_ptr.vmem [resolvable:$true] %s648
          %654 = dma.vmem_to_hbm [thread:$0]  %s649, 2048, %s647, %s633, 128, 512, 8
        $region56: #{tpu_custom_call.1} parent=31 // pred_fallthru
          _
      $region32: #{tpu_custom_call.1} parent=5 // pred_fallthru
        _
      %p655 = scmp.le.s32.totalorder 2, %s18
      // Predicated region
      $region57: #{tpu_custom_call.1} parent=5 // pred_check
        %p656 = pneg %p655
      $region58: #{tpu_custom_call.1} parent=5 // pred_check_branch
        %658 = sbr.rel (%p656) target = $region60
      $region59: #{tpu_custom_call.1} parent=5 // pred_region
        %s659 = ssub.s32 %s18, 2
        // Predicated region
        $region61: #{tpu_custom_call.1} parent=59 // pred_check
          %p660 = pneg %p150
        $region62: #{tpu_custom_call.1} parent=59 // pred_check_branch
          %662 = sbr.rel (%p660) target = $region64
        $region63: #{tpu_custom_call.1} parent=59 // pred_region
          %s663 = sand.u32 %s135, 1
          %s664 = scalar_lea.sflag [#allocation5], %s663
          %s665 = sand.u32 %s135, 1
          %s666 = smul.addr %s665, 128
          %s667 = scalar_lea.vmem [#allocation9], %s666
          %668 = dma.done %s664, 2048
        $region64: #{tpu_custom_call.1} parent=59 // pred_fallthru
          _
      $region60: #{tpu_custom_call.1} parent=5 // pred_fallthru
        _
    $region6: #{tpu_custom_call.1} parent=1 // loop_footer
      %s22 = sadd.s32 1, %s18
    $region7: #{tpu_custom_call.1} parent=1 // loop_footer_branch
      %17 = sbr.rel target = $region3
    $region8: #{tpu_custom_call.1} parent=1 // loop_exit
      _
    %669 = vsyncpa [#allocation4], 1
    %s670 = scalar_lea.sflag [#allocation4], 1
    %671 = vsyncpa %s670, 1
    %672 = vsyncpa [#allocation7], 1
    %s673 = scalar_lea.sflag [#allocation7], 1
    %674 = vsyncpa %s673, 1
    %675 = vsyncpa [#allocation5], 1
    %s676 = scalar_lea.sflag [#allocation5], 1
    %677 = vsyncpa %s676, 1

</llo_original>
